<compile_context>
chip_gen: v5e
topology: v5e:2x2
jax: 0.10.0
libtpu: 0.0.40
codegen_flags: <defaults>
</compile_context>

<pallas_src>
import math

import jax
import jax.numpy as jnp
from jax import lax
from jax.experimental import pallas as pl
from jax.experimental.pallas import tpu as pltpu


def _kernel(consts_ref, x_ref, o_ref):
    # consts_ref: (2, 1, L) f32 -> [0] = d1 = per_row * div_term(lane)
    #                              [1] = c0 = posoff * div_term + phase
    # x_ref / o_ref: (B, TILE_ROWS, L)
    _, tile_rows, lanes = x_ref.shape
    d1 = consts_ref[0:1]                                   # (1, 1, L)
    c0 = consts_ref[1:2]                                   # (1, 1, L)
    row_base = (pl.program_id(0) * tile_rows).astype(jnp.float32)
    c_tile = row_base * d1 + c0                            # per-tile constant
    row = lax.broadcasted_iota(jnp.int32, (1, tile_rows, lanes), 1).astype(
        jnp.float32
    )
    # One encoding tile for the whole batch (amortizes the sin polynomial).
    enc = jnp.sin(row * d1 + c_tile)                       # (1, TR, L) f32
    # Add in f32, single downcast at the store (cheaper/safer for bf16 on v5e).
    o_ref[...] = (x_ref[...].astype(jnp.float32) + enc).astype(o_ref.dtype)


def sinusoidal_encode(x: jax.Array) -> jax.Array:
    """x: (B, S, D) float array. Returns x + sinusoidal positional encoding."""
    b, s, d = x.shape

    # ---- lane-dense (B, rows, L) view ---------------------------------------
    if d % 128 == 0:
        lanes, rows, per_row = d, s, 1
        x_view = x
    else:
        l = d * 128 // math.gcd(d, 128)                    # lcm(d, 128)
        if l <= 1024 and (s * d) % l == 0:
            lanes, rows, per_row = l, (s * d) // l, l // d
            x_view = x.reshape(b, rows, lanes)
        else:
            # TODO(synk): pad s*d to a multiple of lcm(d,128) to keep stores
            # unmasked for awkward D; masked-vst fallback below is still correct.
            lanes, rows, per_row = d, s, 1
            x_view = x

    # ---- per-lane constants, algebraically folded ---------------------------
    # angle(flat_row, lane) = flat_row * d1(lane) + c0(lane)
    lane = jnp.arange(lanes, dtype=jnp.int32)
    dim = lane % d
    div = jnp.exp((dim // 2).astype(jnp.float32) * (-2.0 * math.log(10000.0) / d))
    phase = (dim % 2).astype(jnp.float32) * (math.pi / 2.0)  # odd dims: sin->cos
    posoff = (lane // d).astype(jnp.float32)
    d1 = float(per_row) * div
    c0 = posoff * div + phase
    consts = jnp.stack([d1, c0]).reshape(2, 1, lanes).astype(jnp.float32)
    # NOTE: positions are carried in f32 -> exact for seq_len < 2**24.

    # ---- tile sizing: ~4 MiB per pipelined buffer, dtype-aware sublanes -----
    itemsize = x.dtype.itemsize
    sub = {4: 8, 2: 16, 1: 32}.get(itemsize, 8)
    per_buf_budget = 4 << 20
    tr = per_buf_budget // max(1, b * lanes * itemsize)
    tile_rows = max(sub, (tr // sub) * sub)
    if rows <= tile_rows:
        tile_rows = rows            # full extent satisfies the (8,128) rule
    grid = (pl.cdiv(rows, tile_rows),)

    tile_bytes = b * tile_rows * lanes * itemsize
    enc_bytes = tile_rows * lanes * 4
    # in + out, double-buffered, plus the f32 encoding temp and headroom.
    vmem_limit = int(min(max(4 * tile_bytes + enc_bytes + (4 << 20), 16 << 20),
                         96 << 20))

    out = pl.pallas_call(
        _kernel,
        out_shape=jax.ShapeDtypeStruct((b, rows, lanes), x.dtype),
        grid_spec=pltpu.PrefetchScalarGridSpec(
            num_scalar_prefetch=0,
            grid=grid,
            in_specs=[
                pl.BlockSpec((2, 1, lanes), lambda ri: (0, 0, 0)),
                pl.BlockSpec((b, tile_rows, lanes), lambda ri: (0, ri, 0)),
            ],
            out_specs=pl.BlockSpec((b, tile_rows, lanes), lambda ri: (0, ri, 0)),
        ),
        input_output_aliases={1: 0},   # out reuses x's HBM buffer (needs donation)
        compiler_params=pltpu.CompilerParams(
            dimension_semantics=("parallel",),
            vmem_limit_bytes=vmem_limit,
        ),
    )(consts, x_view)

    return out.reshape(b, s, d)


def _reference(x: jax.Array) -> jax.Array:
    """Plain-JAX port of the PyTorch forward for verification."""
    _, seq_len, d_model = x.shape
    pos = jnp.arange(seq_len, dtype=jnp.float32)[:, None]
    div_term = jnp.exp(
        jnp.arange(0, d_model, 2, dtype=jnp.float32)
        * (-math.log(10000.0) / d_model)
    )
    enc = jnp.zeros((seq_len, d_model), dtype=jnp.float32)
    enc = enc.at[:, 0::2].set(jnp.sin(pos * div_term))
    enc = enc.at[:, 1::2].set(jnp.cos(pos * div_term))
    return x + enc[None, :, :]


if __name__ == "__main__":
    # SinusoidalEncoder has no learned parameters; the encoding is derived from
    # (seq_len, d_model) of the input.
    key = jax.random.PRNGKey(0)
    batch, seq_len, d_model = 2, 8, 32
    x = jax.random.normal(key, (batch, seq_len, d_model), dtype=jnp.float32)

    ref = jax.block_until_ready(_reference(x))

    # Donate x so input_output_aliases actually avoids the defensive copy.
    encode = jax.jit(sinusoidal_encode, donate_argnums=0)
    out = jax.block_until_ready(encode(x))

    assert out.shape == (batch, seq_len, d_model)
    assert jnp.allclose(out, ref, atol=1e-5, rtol=1e-5), "mismatch vs reference"

    print("KERNEL_OK")
</pallas_src>

<mosaic_0001>
module attributes {stable_mosaic.version = 11 : i64} {
  func.func @_kernel(%arg0: i32, %arg1: memref<2x1x128xf32, #tpu.memory_space<vmem>>, %arg2: memref<2x2x128xf32, #tpu.memory_space<vmem>>, %arg3: memref<2x2x128xf32, #tpu.memory_space<vmem>>) attributes {dimension_semantics = [#tpu.dimension_semantics<parallel>], iteration_bounds = array<i64: 1>, scalar_prefetch = 0 : i64, scratch_operands = 0 : i64, tpu.core_type = #tpu.core_type<tc>, window_params = [{pipeline_mode = #tpu.pipeline_mode<synchronous>, transform_indices = @transform_0, window_bounds = array<i64: 2, 1, 128>}, {transform_indices = @transform_1, window_bounds = array<i64: 2, 2, 128>}, {transform_indices = @transform_2, window_bounds = array<i64: 2, 2, 128>}]} {
    %c0 = arith.constant 0 : index
    %c0_0 = arith.constant 0 : index
    %c0_1 = arith.constant 0 : index
    %0 = vector.load %arg1[%c0, %c0_0, %c0_1] : memref<2x1x128xf32, #tpu.memory_space<vmem>>, vector<1x1x128xf32>
    %c1 = arith.constant 1 : index
    %c0_2 = arith.constant 0 : index
    %c0_3 = arith.constant 0 : index
    %1 = vector.load %arg1[%c1, %c0_2, %c0_3] : memref<2x1x128xf32, #tpu.memory_space<vmem>>, vector<1x1x128xf32>
    %c2_i32 = arith.constant 2 : i32
    %2 = arith.muli %arg0, %c2_i32 : i32
    %3 = arith.sitofp %2 : i32 to f32
    %4 = vector.broadcast %3 : f32 to vector<1x1x128xf32>
    %5 = arith.mulf %4, %0 : vector<1x1x128xf32>
    %6 = arith.addf %5, %1 : vector<1x1x128xf32>
    %7 = tpu.iota {dimensions = array<i32: 1>} : vector<1x2x128xi32>
    %8 = arith.sitofp %7 : vector<1x2x128xi32> to vector<1x2x128xf32>
    %9 = vector.broadcast %0 : vector<1x1x128xf32> to vector<1x2x128xf32>
    %10 = arith.mulf %8, %9 : vector<1x2x128xf32>
    %11 = vector.broadcast %6 : vector<1x1x128xf32> to vector<1x2x128xf32>
    %12 = arith.addf %10, %11 : vector<1x2x128xf32>
    %13 = math.sin %12 : vector<1x2x128xf32>
    %c0_4 = arith.constant 0 : index
    %c0_5 = arith.constant 0 : index
    %c0_6 = arith.constant 0 : index
    %14 = vector.load %arg2[%c0_4, %c0_5, %c0_6] : memref<2x2x128xf32, #tpu.memory_space<vmem>>, vector<2x2x128xf32>
    %15 = vector.broadcast %13 : vector<1x2x128xf32> to vector<2x2x128xf32>
    %16 = arith.addf %14, %15 : vector<2x2x128xf32>
    %c0_7 = arith.constant 0 : index
    %c0_8 = arith.constant 0 : index
    %c0_9 = arith.constant 0 : index
    %17 = vector.load %arg3[%c0_7, %c0_8, %c0_9] : memref<2x2x128xf32, #tpu.memory_space<vmem>>, vector<2x2x128xf32>
    tpu.vector_store %arg3[%c0_7, %c0_8, %c0_9], %16 {strides = array<i32>} : memref<2x2x128xf32, #tpu.memory_space<vmem>>, vector<2x2x128xf32>,
    return
  }
  func.func @transform_0(%arg0: i32) -> (i32, i32, i32) {
    %c0_i32 = arith.constant 0 : i32
    %c0_i32_0 = arith.constant 0 : i32
    %c0_i32_1 = arith.constant 0 : i32
    %c0_i32_2 = arith.constant 0 : i32
    return %c0_i32, %c0_i32_0, %c0_i32_1 : i32, i32, i32
  }
  func.func @transform_1(%arg0: i32) -> (i32, i32, i32) {
    %c0_i32 = arith.constant 0 : i32
    %c0_i32_0 = arith.constant 0 : i32
    %c0_i32_1 = arith.constant 0 : i32
    return %c0_i32, %arg0, %c0_i32_0 : i32, i32, i32
  }
  func.func @transform_2(%arg0: i32) -> (i32, i32, i32) {
    %c0_i32 = arith.constant 0 : i32
    %c0_i32_0 = arith.constant 0 : i32
    %c0_i32_1 = arith.constant 0 : i32
    return %c0_i32, %arg0, %c0_i32_0 : i32, i32, i32
  }
}

</mosaic_0001>

<llo_original>
// kernel: sinusoidal_encode.1
$region0: #{sinusoidal_encode.1}
  #allocation0 [shape = 'u32[]', space=smem, size = 0x4, offset = 0x4, fixed_abs, tag = 'smem constant byte address 0x4 - core index']
  #allocation1 [shape = 'u32[72,128]{1,0:T(1,128)}', space=vmem, size = 0x9000, scoped, tag = 'internal scratch']
  %s0 = inlined_call_operand.vmem [shape: f32[2,1,128], index: 0, kind: input, shape index: {}]
  %s1 = inlined_call_operand.vmem [shape: f32[2,2,128], index: 1, kind: input, shape index: {}, may-alias: {1,2}]
  %s2 = inlined_call_operand.vmem [shape: f32[2,2,128], index: 2, kind: output, shape index: {}, may-alias: {1,2}]
  %s3 = sld [smem:[#allocation0]]
  $region18: #{sinusoidal_encode.1} parent=0
    _
  %s5 = ssub.s32 1, %s3
  %s6 = scalar_select 0, %s5, %s3
  // Predicated region
  $region2: #{sinusoidal_encode.1} parent=0 // pred_check
    _
  $region3: #{sinusoidal_encode.1} parent=0 // pred_check_branch
    %8 = sbr.rel (0) target = $region5
  $region4: #{sinusoidal_encode.1} parent=0 // pred_region
    _
  $region5: #{sinusoidal_encode.1} parent=0 // pred_fallthru
    _
  // Predicated region
  $region6: #{sinusoidal_encode.1} parent=0 // pred_check
    _
  $region7: #{sinusoidal_encode.1} parent=0 // pred_check_branch
    %10 = sbr.rel (0) target = $region9
  $region8: #{sinusoidal_encode.1} parent=0 // pred_region
    _
  $region9: #{sinusoidal_encode.1} parent=0 // pred_fallthru
    _
  %v11 = vld [vmem:[%s0] sm:$0x1]
  %s12 = scalar_lea.vmem %s0, 1
  %v13 = vld [vmem:[%s12] sm:$0x1]
  %s14 = smul.u32 0, 2
  %s15 = scvt.s32.f32 %s14
  %v16 = vstv %s15
  %v17 = vmul.f32 %v16, %v11
  %v18 = vadd.f32 %v17, %v13
  %v19 = vlaneseq
  %v20 = vshrl.u32 %v19, 7
  %v21 = vcvt.s32.f32 %v20
  %v23 = vperm.slane %v11, 0
  %v25 = vmul.f32 %v21, %v23
  %v27 = vperm.slane %v18, 0
  %v29 = vadd.f32 %v25, %v27
  %v30 = vand.u32 2147483647, %v29
  %vm31 = vcmp.le.f32.partialorder %v30, 0.7853982
  %vm32 = vcmp.lt.s32.totalorder %v29, 0
  %v33 = vand.u32 %v29, 2139095040
  %v34 = vshrl.u32 %v33, 23
  %v35 = vsub.s32 %v34, 127
  %v36 = vand.u32 2147483647, %v29
  %v37 = vand.u32 %v36, 8388607
  %v38 = vor.u32 %v37, 8388608
  %v39 = vsub.s32 0, %v38
  %v40 = vadd.s32 %v35, 1
  %vm41 = vcmp.gt.s32.totalorder %v40, 0
  %v42 = vsel %vm41, %v40, 0
  %v43 = vshrl.u32 %v42, 5
  %v44 = vand.u32 %v42, 31
  %v45 = vsub.s32 32, %v44
  %v46 = vshrl.u32 683565275, %v45
  %v47 = vshll.u32 683565275, %v44
  %v48 = vshrl.u32 2475754826, %v45
  %v49 = vor.u32 %v47, %v48
  %v50 = vshll.u32 2475754826, %v44
  %v51 = vshrl.u32 2131351028, %v45
  %v52 = vor.u32 %v50, %v51
  %v53 = vshll.u32 2131351028, %v44
  %v54 = vshrl.u32 2102212464, %v45
  %v55 = vor.u32 %v53, %v54
  %v56 = vshll.u32 2102212464, %v44
  %v57 = vshrl.u32 920167782, %v45
  %v58 = vor.u32 %v56, %v57
  %v59 = vshll.u32 920167782, %v44
  %v60 = vshrl.u32 1326507024, %v45
  %v61 = vor.u32 %v59, %v60
  %vm62 = vcmp.lt.s32.totalorder %v43, 1
  %vm63 = vcmp.lt.s32.totalorder %v43, 2
  %vm64 = vcmp.lt.s32.totalorder %v43, 3
  %vm65 = vcmp.lt.s32.totalorder %v43, 4
  %v66 = vsel %vm62, %v46, %v49
  %v67 = vsel %vm65, %v55, 2102212464
  %v68 = vsel %vm64, %v52, %v67
  %v69 = vsel %vm63, %v66, %v68
  %v70 = vsel %vm62, %v49, %v52
  %v71 = vsel %vm65, %v58, 920167782
  %v72 = vsel %vm64, %v55, %v71
  %v73 = vsel %vm63, %v70, %v72
  %v74 = vsel %vm62, %v52, %v55
  %v75 = vsel %vm65, %v61, 1326507024
  %v76 = vsel %vm64, %v58, %v75
  %v77 = vsel %vm63, %v74, %v76
  %v78 = vshll.u32 %v38, 8
  %v79 = vand.u32 %v78, 65535
  %v80 = vshrl.u32 %v78, 16
  %v81 = vand.u32 %v77, 65535
  %v82 = vshrl.u32 %v77, 16
  %v83 = vmul.u32 %v79, %v81
  %v84 = vmul.u32 %v79, %v82
  %v85 = vmul.u32 %v80, %v81
  %v86 = vmul.u32 %v80, %v82
  %v87 = vshll.u32 %v84, 16
  %v88 = vshrl.u32 %v84, 16
  %v89 = vshll.u32 %v85, 16
  %v90 = vshrl.u32 %v85, 16
  %vm91 = vc.u32 %v83, %v87
  %v92 = vsel %vm91, 1, 0
  %v93 = vadd.s32 %v83, %v87
  %v94 = vadd.s32 %v86, %v92
  %vm95 = vc.u32 %v93, %v89
  %v96 = vsel %vm95, 1, 0
  %v97 = vadd.s32 %v93, %v89
  %v98 = vadd.s32 %v94, %v96
  %v99 = vadd.s32 %v98, %v88
  %v100 = vadd.s32 %v99, %v90
  %v101 = vand.u32 %v78, 65535
  %v102 = vshrl.u32 %v78, 16
  %v103 = vand.u32 %v73, 65535
  %v104 = vshrl.u32 %v73, 16
  %v105 = vmul.u32 %v101, %v103
  %v106 = vmul.u32 %v101, %v104
  %v107 = vmul.u32 %v102, %v103
  %v108 = vmul.u32 %v102, %v104
  %v109 = vshll.u32 %v106, 16
  %v110 = vshrl.u32 %v106, 16
  %v111 = vshll.u32 %v107, 16
  %v112 = vshrl.u32 %v107, 16
  %vm113 = vc.u32 %v105, %v109
  %v114 = vsel %vm113, 1, 0
  %v115 = vadd.s32 %v105, %v109
  %v116 = vadd.s32 %v108, %v114
  %vm117 = vc.u32 %v115, %v111
  %v118 = vsel %vm117, 1, 0
  %v119 = vadd.s32 %v115, %v111
  %v120 = vadd.s32 %v116, %v118
  %v121 = vadd.s32 %v120, %v110
  %v122 = vadd.s32 %v121, %v112
  %v123 = vmul.u32 %v78, %v69
  %v124 = vadd.s32 %v100, %v119
  %vm125 = vc.u32 %v100, %v119
  %v126 = vadd.s32 %v122, 1
  %v127 = vsel %vm125, %v126, %v122
  %v128 = vadd.s32 %v123, %v127
  %v129 = vadd.s32 %v128, 536870912
  %v130 = vshrl.u32 %v129, 30
  %v131 = vshll.u32 %v130, 30
  %v132 = vsub.s32 %v128, %v131
  %vm133 = vcmp.lt.s32.totalorder %v132, 0
  %v134 = vsub.s32 0, %v132
  %v135 = vsel %vm133, %v134, %v132
  %v136 = vclz %v135
  %v137 = vsub.s32 %v136, 2
  %vm138 = vcmp.gt.s32.totalorder 0, %v137
  %v139 = vsel %vm138, 0, %v137
  %v140 = vsub.s32 32, %v139
  %v141 = vshll.u32 %v132, %v139
  %v142 = vshrl.u32 %v124, %v140
  %v143 = vor.u32 %v141, %v142
  %v144 = vsub.s32 4294967266, %v139
  %v145 = vadd.s32 %v144, 127
  %v146 = vshll.u32 %v145, 23
  %v147 = vor.u32 4788187, %v146
  %v148 = vand.u32 2147483647, %v147
  %v150 = vcvt.s32.f32 %v143
  %v151 = vmul.f32 %v150, %v148
  %v152 = vxor.u32 %v151, 2147483648
  %v153 = vsel %vm32, %v152, %v151
  %v154 = vsub.s32 4, %v130
  %v155 = vsel %vm32, %v154, %v130
  %v156 = vsel %vm31, %v29, %v153
  %v157 = vsel %vm31, 0, %v155
  %v158 = vmul.f32 %v156, %v156
  %v159 = vmul.f32 %v158, -0.001358992
  %v160 = vadd.f32 %v159, 0.041655596
  %v161 = vmul.f32 %v158, %v160
  %v162 = vadd.f32 %v161, -0.4999988
  %v163 = vmul.f32 %v158, %v162
  %v164 = vadd.f32 1.0, %v163
  %v165 = vmul.f32 %v156, %v156
  %v166 = vmul.f32 %v165, -0.00019511016
  %v167 = vadd.f32 %v166, 0.008332121
  %v168 = vmul.f32 %v165, %v167
  %v169 = vadd.f32 %v168, -0.16666654
  %v170 = vmul.f32 %v165, %v169
  %v171 = vadd.f32 %v170, 1.0
  %v172 = vmul.f32 %v171, %v156
  %vm173 = vweird.f32 %v29
  %v174 = vadd.s32 %v157, 3
  %v175 = vand.u32 %v174, 3
  %vm176 = vcmp.lt.s32.totalorder %v175, 2
  %vm177 = vcmp.eq.s32.totalorder %v175, 0
  %v178 = vxor.u32 %v172, 2147483648
  %v179 = vsel %vm177, %v164, %v178
  %vm180 = vcmp.eq.s32.totalorder %v175, 2
  %v181 = vxor.u32 %v164, 2147483648
  %v182 = vsel %vm180, %v181, %v172
  %v183 = vsel %vm176, %v179, %v182
  %v184 = vsel %vm173, nan, %v183
  %v185 = vld [vmem:[%s1] sm:$0x3]
  %v186 = vld [vmem:[%s1 + $0x2] sm:$0x3]
  %v187 = vadd.f32 %v185, %v184
  %v188 = vadd.f32 %v186, %v184
  %189 = vst [vmem:[%s2] sm:$0x3] %v187
  %190 = vst [vmem:[%s2 + $0x2] sm:$0x3] %v188
  // Predicated region
  $region10: #{sinusoidal_encode.1} parent=0 // pred_check
    _
  $region11: #{sinusoidal_encode.1} parent=0 // pred_check_branch
    %192 = sbr.rel (0) target = $region13
  $region12: #{sinusoidal_encode.1} parent=0 // pred_region
    _
  $region13: #{sinusoidal_encode.1} parent=0 // pred_fallthru
    _
  // Predicated region
  $region14: #{sinusoidal_encode.1} parent=0 // pred_check
    _
  $region15: #{sinusoidal_encode.1} parent=0 // pred_check_branch
    %194 = sbr.rel (0) target = $region17
  $region16: #{sinusoidal_encode.1} parent=0 // pred_region
    _
  $region17: #{sinusoidal_encode.1} parent=0 // pred_fallthru
    _

</llo_original>
